<compile_context>
chip_gen: v5e
topology: v5e:2x2
jax: 0.10.0
libtpu: 0.0.40
codegen_flags: <defaults>
</compile_context>

<pallas_src>
import numpy as np
import jax
import jax.numpy as jnp
from jax import lax
from jax.experimental import pallas as pl
from jax.experimental.pallas import tpu as pltpu


LANE = 128                       # TPU lane width
_MAX_MODE_BLOCKS = 4             # cap the per-step mode tile at 4*128 = 512 lanes
_W_TILE_BUDGET = 24 << 20        # cap for the double-buffered weight tile
_TILE_BUDGET = 32 << 20          # cap for the double-buffered (w + x + out) tiles
_VMEM_LIMIT_BYTES = 48 << 20     # raises the scoped-VMEM limit above the
                                 # v5e(16)/v6e,v7x(32 MiB) defaults, with
                                 # headroom under v7x's 64 MiB physical VMEM.
_UNROLL_EIN_MAX = 8              # fully unroll the E_in loop only when short


def _cdiv(a, b):
    return (a + b - 1) // b


def _choose_mode_block(lf, ein, eout, requested=None):
    """Pick the mode-tile width tm (multiple of 128 lanes)."""
    if requested is not None:
        assert requested > 0 and requested % LANE == 0
        return requested
    blocks = max(1, min(_cdiv(lf, LANE), _MAX_MODE_BLOCKS))
    # The (double-buffered) weight tile dominates the per-step VMEM footprint.
    while blocks > 1 and 2 * (2 * ein * eout * blocks * LANE * 4) > _W_TILE_BUDGET:
        blocks -= 1
    return blocks * LANE


def _choose_batch_block(batch, ein, eout, tm):
    """Pick how many batch elements to process per grid step."""
    w_bytes = 2 * ein * eout * tm * 4
    for bt in (8, 4, 2, 1):
        if batch % bt:
            continue
        xo_bytes = bt * 2 * (ein + eout) * tm * 4
        if 2 * (w_bytes + xo_bytes) <= _TILE_BUDGET:
            return bt
    return 1


def _make_spectral_kernel(bt_blk, ein, eout, tm, n_wb):
    """Build the kernel for fixed (Bt, Ein, Eout, tm, #weight-blocks)."""
    n_sub = tm // LANE

    def kernel(x_ref, w_ref, o_ref):
        # x_ref: (Bt, 1, 2, Ein,  tm)   spectrum,  [real, imag] stacked on axis 2
        # w_ref: (1,  2, Ein, Eout, tm) weights,   [real, imag] stacked on axis 1
        # o_ref: (Bt, 1, 2, Eout, tm)   output spectrum
        mb = pl.program_id(1)

        @pl.when(mb < n_wb)
        def _compute():
            for bt in range(bt_blk):
                for ms in range(n_sub):
                    sl = pl.ds(ms * LANE, LANE)
                    acc_r = jnp.zeros((eout, LANE), jnp.float32)
                    acc_i = jnp.zeros((eout, LANE), jnp.float32)

                    def step(e, acc_r, acc_i, bt=bt, sl=sl):
                        xr = x_ref[bt, 0, 0, pl.ds(e, 1), sl]   # (1, LANE)
                        xi = x_ref[bt, 0, 1, pl.ds(e, 1), sl]
                        wr = w_ref[0, 0, e, :, sl]              # (Eout, LANE)
                        wi = w_ref[0, 1, e, :, sl]
                        acc_r = acc_r + xr * wr - xi * wi
                        acc_i = acc_i + xr * wi + xi * wr
                        return acc_r, acc_i

                    if ein <= _UNROLL_EIN_MAX:
                        for e in range(ein):                    # fully unrolled
                            acc_r, acc_i = step(e, acc_r, acc_i)
                    else:
                        acc_r, acc_i = lax.fori_loop(
                            0, ein, lambda e, c: step(e, c[0], c[1]),
                            (acc_r, acc_i), unroll=_UNROLL_EIN_MAX)

                    o_ref[bt, 0, 0, :, sl] = acc_r
                    o_ref[bt, 0, 1, :, sl] = acc_i

        @pl.when(mb >= n_wb)
        def _zero_tail():
            # Mode blocks past the last weight block: out_ft is identically 0.
            o_ref[...] = jnp.zeros(o_ref.shape, o_ref.dtype)

    return kernel


def spectral_mix_pallas(x_k, w_k, *, lf_pad, tm, bt, n_wb):
    """out[b,h,o,m] = sum_e x[b,h,e,m] * w[h,e,o,m]   (complex, split r/i).

    x_k : (B, H, 2, Ein, Mw_pad)   spectrum at the selected input modes.
    w_k : (H, 2, Ein, Eout, Mw_pad) weights (mode axis zero-padded past M).
    Returns (B, H, 2, Eout, lf_pad) float32; modes >= Mw_pad are written as 0.
    """
    B, H, _, ein, mw_pad = x_k.shape
    eout = w_k.shape[3]
    assert mw_pad == n_wb * tm and lf_pad % tm == 0 and B % bt == 0
    n_mb = lf_pad // tm
    assert n_mb >= n_wb
    wb_last = n_wb - 1

    # x / w block indices are clamped for the pure-zero tail blocks; weight
    # block index is independent of b (innermost axis) -> DMA'd once per
    # (head, mode-block) and reused across the batch.
    x_spec = pl.BlockSpec(
        (bt, 1, 2, ein, tm),
        lambda h, mb, b: (b, h, 0, 0, jnp.minimum(mb, wb_last)))
    w_spec = pl.BlockSpec(
        (1, 2, ein, eout, tm),
        lambda h, mb, b: (h, 0, 0, 0, jnp.minimum(mb, wb_last)))
    o_spec = pl.BlockSpec(
        (bt, 1, 2, eout, tm),
        lambda h, mb, b: (b, h, 0, 0, mb))

    return pl.pallas_call(
        _make_spectral_kernel(bt, ein, eout, tm, n_wb),
        grid=(H, n_mb, B // bt),
        in_specs=[x_spec, w_spec],
        out_specs=o_spec,
        out_shape=jax.ShapeDtypeStruct((B, H, 2, eout, lf_pad), jnp.float32),
        compiler_params=pltpu.CompilerParams(
            dimension_semantics=("parallel", "parallel", "arbitrary"),
            vmem_limit_bytes=_VMEM_LIMIT_BYTES),
    )(x_k, w_k)


class SpectralConv1dPallas:
    def __init__(self, in_channels, out_channels, seq_len, modes1=0,
                 key=jax.random.PRNGKey(0), mode_block=None):
        assert in_channels % 8 == 0 and out_channels % 8 == 0, \
            "in/out channels must be divisible by 8 (per-head split)"
        self.in_channels = in_channels
        self.out_channels = out_channels
        self.modes1 = modes1
        self.seq_len = seq_len

        # Mode-index selection logic (identical to the PyTorch module),
        # with a pinned seed for the shuffled branches (reproducibility).
        rng = np.random.RandomState(0)
        if modes1 > 10000:
            modes2 = modes1 - 10000
            index0 = list(range(0, min(seq_len // 4, modes2 // 2)))
            index1 = list(range(len(index0), seq_len // 2))
            rng.shuffle(index1)
            index1 = index1[:min(seq_len // 4, modes2 // 2)]
            self.index = sorted(index0 + index1)
            self._contiguous = False
        elif modes1 > 1000:
            modes2 = modes1 - 1000
            idx = list(range(0, seq_len // 2))
            rng.shuffle(idx)
            self.index = idx[:modes2]
            self._contiguous = False
        else:
            self.index = list(range(0, min(seq_len // 2, modes1)))
            self._contiguous = True

        self.scale = 1.0 / (in_channels * out_channels)
        M = len(self.index)
        ein = in_channels // 8
        eout = out_channels // 8
        kr, ki = jax.random.split(key)
        # torch.rand(..., dtype=cfloat): real & imag each uniform [0, 1).
        shape = (8, ein, eout, M)
        self.weights_r = self.scale * jax.random.uniform(kr, shape, jnp.float32)
        self.weights_i = self.scale * jax.random.uniform(ki, shape, jnp.float32)

        # --- kernel-layout weights, packed once --------------------------------
        self._m = M
        lf = seq_len // 2 + 1
        self._tm = _choose_mode_block(lf, ein, eout, requested=mode_block)
        if M > 0:
            mw_pad = _cdiv(M, self._tm) * self._tm
            self._mw_pad = mw_pad
            self._n_wb = mw_pad // self._tm
            # (8, 2, Ein, Eout, Mw_pad): real/imag stacked, mode axis zero-padded.
            # (Optional: store in bf16 on v6e/v7x and upcast in-kernel for more
            #  tile headroom; kept f32 here.)
            w_stack = jnp.stack([self.weights_r, self.weights_i], axis=1)
            self._w_k = jnp.pad(
                w_stack, ((0, 0), (0, 0), (0, 0), (0, 0), (0, mw_pad - M)))

    def __call__(self, q, k=None, v=None, mask=None):
        B, L, H, E = q.shape
        assert H == 8, "weights1 hard-codes 8 heads"
        assert E == self.in_channels // 8, (E, self.in_channels)
        M = self._m
        ein = E
        eout = self.out_channels // 8
        Lf = L // 2 + 1

        # glue: permute + rFFT in plain JAX
        # TODO(synk): rfft/irfft have no clean Pallas equivalent; left in jnp.fft.
        x = jnp.transpose(q, (0, 2, 3, 1)).astype(jnp.float32)   # (B, H, Ein, L)
        x_ft = jnp.fft.rfft(x, axis=-1)                          # (B, H, Ein, Lf)

        if M == 0:
            out_ft = jnp.zeros((B, H, eout, Lf), jnp.complex64)
            return jnp.fft.irfft(out_ft, n=L, axis=-1), None

        tm = self._tm
        n_wb = self._n_wb
        mw_pad = self._mw_pad
        lf_pad = max(_cdiv(Lf, tm) * tm, mw_pad)
        bt = _choose_batch_block(B, ein, eout, tm)

        # Mode selection: static slice on the common contiguous branch (no lane
        # gather); jnp.take only for the shuffled-index branches.
        if self._contiguous:
            x_sel = x_ft[..., :M]                                # (B, H, Ein, M)
        else:
            idx = jnp.asarray(self.index, dtype=jnp.int32)
            x_sel = jnp.take(x_ft, idx, axis=-1)                 # (B, H, Ein, M)

        # Pack real/imag into one array (3 DMAs per grid step instead of 6) and
        # zero-pad the mode axis to the weight-block extent.
        x_k = jnp.stack([jnp.real(x_sel), jnp.imag(x_sel)], axis=2)
        x_k = jnp.pad(x_k, ((0, 0), (0, 0), (0, 0), (0, 0), (0, mw_pad - M)))

        out = spectral_mix_pallas(x_k, self._w_k, lf_pad=lf_pad, tm=tm,
                                  bt=bt, n_wb=n_wb)    # (B, H, 2, Eout, lf_pad)

        # The kernel already wrote the full-length spectrum (zero beyond the
        # selected modes) -> no scatter-into-zeros pass; slice + complex + irFFT.
        out_ft = lax.complex(out[:, :, 0, :, :Lf], out[:, :, 1, :, :Lf])
        x_out = jnp.fft.irfft(out_ft, n=L, axis=-1)              # (B, H, Eout, L)
        return x_out, None


def _reference_forward(module, q):
    """Pure-JAX reference of the PyTorch forward for correctness checking."""
    B, L, H, E = q.shape
    x = jnp.transpose(q, (0, 2, 3, 1)).astype(jnp.float32)
    x_ft = jnp.fft.rfft(x, axis=-1)
    w = (module.weights_r + 1j * module.weights_i).astype(jnp.complex64)
    out_ft = jnp.zeros((B, H, module.out_channels // 8, L // 2 + 1),
                       dtype=jnp.complex64)
    for wi, i in enumerate(module.index):
        out_ft = out_ft.at[:, :, :, wi].set(
            jnp.einsum('bhi,hio->bho', x_ft[:, :, :, i], w[:, :, :, wi]))
    return jnp.fft.irfft(out_ft, n=L, axis=-1)


def _run_case(B, L, in_channels, out_channels, modes1, key, mode_block=None):
    H = 8
    E = in_channels // 8
    kq, kw = jax.random.split(key)
    q = jax.random.normal(kq, (B, L, H, E), dtype=jnp.float32)
    layer = SpectralConv1dPallas(in_channels, out_channels, L, modes1,
                                 key=kw, mode_block=mode_block)
    out, _ = layer(q, None, None, None)
    out = jax.block_until_ready(out)
    ref = jax.block_until_ready(_reference_forward(layer, q))
    assert out.shape == (B, H, out_channels // 8, L), out.shape
    np.testing.assert_allclose(np.asarray(out), np.asarray(ref),
                               rtol=1e-4, atol=1e-5)


if __name__ == "__main__":
    key = jax.random.PRNGKey(0)
    k1, k2 = jax.random.split(key)

    # Case 1: small shapes, contiguous modes (common path).
    # q: (B=2, L=16, H=8, E=4), in=out=32 channels, modes1=8.
    _run_case(B=2, L=16, in_channels=32, out_channels=32, modes1=8, key=k1)

    # Case 2: shuffled-index branch + multi mode-block grid with a zero tail
    # (forces tm=128 so n_mode_blocks > n_weight_blocks).
    _run_case(B=2, L=640, in_channels=32, out_channels=32, modes1=1016,
              key=k2, mode_block=128)

    print("KERNEL_OK")
</pallas_src>

<mosaic_0001>
module attributes {stable_mosaic.version = 11 : i64} {
  func.func @kernel(%arg0: i32, %arg1: i32, %arg2: i32, %arg3: memref<2x1x2x4x128xf32, #tpu.memory_space<vmem>>, %arg4: memref<1x2x4x4x128xf32, #tpu.memory_space<vmem>>, %arg5: memref<2x1x2x4x128xf32, #tpu.memory_space<vmem>>) attributes {dimension_semantics = [#tpu.dimension_semantics<parallel>, #tpu.dimension_semantics<parallel>, #tpu.dimension_semantics<arbitrary>], iteration_bounds = array<i64: 8, 1, 1>, scalar_prefetch = 0 : i64, scratch_operands = 0 : i64, tpu.core_type = #tpu.core_type<tc>, window_params = [{transform_indices = @transform_0, window_bounds = array<i64: 2, 1, 2, 4, 128>}, {transform_indices = @transform_1, window_bounds = array<i64: 1, 2, 4, 4, 128>}, {transform_indices = @transform_2, window_bounds = array<i64: 2, 1, 2, 4, 128>}]} {
    %c1_i32 = arith.constant 1 : i32
    %0 = arith.cmpi slt, %arg1, %c1_i32 : i32
    %1 = arith.extui %0 : i1 to i32
    %c0_i32 = arith.constant 0 : i32
    %2 = arith.cmpi ne, %1, %c0_i32 : i32
    scf.if %2 {
      %cst = arith.constant 0.000000e+00 : f32
      %6 = vector.broadcast %cst : f32 to vector<4x128xf32>
      %cst_2 = arith.constant 0.000000e+00 : f32
      %7 = vector.broadcast %cst_2 : f32 to vector<4x128xf32>
      %c0 = arith.constant 0 : index
      %c0_3 = arith.constant 0 : index
      %c0_4 = arith.constant 0 : index
      %c0_5 = arith.constant 0 : index
      %c0_6 = arith.constant 0 : index
      %8 = vector.load %arg3[%c0, %c0_3, %c0_4, %c0_5, %c0_6] : memref<2x1x2x4x128xf32, #tpu.memory_space<vmem>>, vector<1x1x1x1x128xf32>
      %9 = vector.shape_cast %8 : vector<1x1x1x1x128xf32> to vector<1x128xf32>
      %c0_7 = arith.constant 0 : index
      %c0_8 = arith.constant 0 : index
      %c1 = arith.constant 1 : index
      %c0_9 = arith.constant 0 : index
      %c0_10 = arith.constant 0 : index
      %10 = vector.load %arg3[%c0_7, %c0_8, %c1, %c0_9, %c0_10] : memref<2x1x2x4x128xf32, #tpu.memory_space<vmem>>, vector<1x1x1x1x128xf32>
      %11 = vector.shape_cast %10 : vector<1x1x1x1x128xf32> to vector<1x128xf32>
      %c0_11 = arith.constant 0 : index
      %c0_12 = arith.constant 0 : index
      %c0_13 = arith.constant 0 : index
      %c0_14 = arith.constant 0 : index
      %c0_15 = arith.constant 0 : index
      %12 = vector.load %arg4[%c0_11, %c0_12, %c0_13, %c0_14, %c0_15] : memref<1x2x4x4x128xf32, #tpu.memory_space<vmem>>, vector<1x1x1x4x128xf32>
      %13 = vector.shape_cast %12 : vector<1x1x1x4x128xf32> to vector<4x128xf32>
      %c0_16 = arith.constant 0 : index
      %c1_17 = arith.constant 1 : index
      %c0_18 = arith.constant 0 : index
      %c0_19 = arith.constant 0 : index
      %c0_20 = arith.constant 0 : index
      %14 = vector.load %arg4[%c0_16, %c1_17, %c0_18, %c0_19, %c0_20] : memref<1x2x4x4x128xf32, #tpu.memory_space<vmem>>, vector<1x1x1x4x128xf32>
      %15 = vector.shape_cast %14 : vector<1x1x1x4x128xf32> to vector<4x128xf32>
      %16 = vector.broadcast %9 : vector<1x128xf32> to vector<4x128xf32>
      %17 = arith.mulf %16, %13 : vector<4x128xf32>
      %18 = arith.addf %6, %17 : vector<4x128xf32>
      %19 = vector.broadcast %11 : vector<1x128xf32> to vector<4x128xf32>
      %20 = arith.mulf %19, %15 : vector<4x128xf32>
      %21 = arith.subf %18, %20 : vector<4x128xf32>
      %22 = vector.broadcast %9 : vector<1x128xf32> to vector<4x128xf32>
      %23 = arith.mulf %22, %15 : vector<4x128xf32>
      %24 = arith.addf %7, %23 : vector<4x128xf32>
      %25 = vector.broadcast %11 : vector<1x128xf32> to vector<4x128xf32>
      %26 = arith.mulf %25, %13 : vector<4x128xf32>
      %27 = arith.addf %24, %26 : vector<4x128xf32>
      %c0_21 = arith.constant 0 : index
      %c0_22 = arith.constant 0 : index
      %c0_23 = arith.constant 0 : index
      %c1_24 = arith.constant 1 : index
      %c0_25 = arith.constant 0 : index
      %28 = vector.load %arg3[%c0_21, %c0_22, %c0_23, %c1_24, %c0_25] : memref<2x1x2x4x128xf32, #tpu.memory_space<vmem>>, vector<1x1x1x1x128xf32>
      %29 = vector.shape_cast %28 : vector<1x1x1x1x128xf32> to vector<1x128xf32>
      %c0_26 = arith.constant 0 : index
      %c0_27 = arith.constant 0 : index
      %c1_28 = arith.constant 1 : index
      %c1_29 = arith.constant 1 : index
      %c0_30 = arith.constant 0 : index
      %30 = vector.load %arg3[%c0_26, %c0_27, %c1_28, %c1_29, %c0_30] : memref<2x1x2x4x128xf32, #tpu.memory_space<vmem>>, vector<1x1x1x1x128xf32>
      %31 = vector.shape_cast %30 : vector<1x1x1x1x128xf32> to vector<1x128xf32>
      %c0_31 = arith.constant 0 : index
      %c0_32 = arith.constant 0 : index
      %c1_33 = arith.constant 1 : index
      %c0_34 = arith.constant 0 : index
      %c0_35 = arith.constant 0 : index
      %32 = vector.load %arg4[%c0_31, %c0_32, %c1_33, %c0_34, %c0_35] : memref<1x2x4x4x128xf32, #tpu.memory_space<vmem>>, vector<1x1x1x4x128xf32>
      %33 = vector.shape_cast %32 : vector<1x1x1x4x128xf32> to vector<4x128xf32>
      %c0_36 = arith.constant 0 : index
      %c1_37 = arith.constant 1 : index
      %c1_38 = arith.constant 1 : index
      %c0_39 = arith.constant 0 : index
      %c0_40 = arith.constant 0 : index
      %34 = vector.load %arg4[%c0_36, %c1_37, %c1_38, %c0_39, %c0_40] : memref<1x2x4x4x128xf32, #tpu.memory_space<vmem>>, vector<1x1x1x4x128xf32>
      %35 = vector.shape_cast %34 : vector<1x1x1x4x128xf32> to vector<4x128xf32>
      %36 = vector.broadcast %29 : vector<1x128xf32> to vector<4x128xf32>
      %37 = arith.mulf %36, %33 : vector<4x128xf32>
      %38 = arith.addf %21, %37 : vector<4x128xf32>
      %39 = vector.broadcast %31 : vector<1x128xf32> to vector<4x128xf32>
      %40 = arith.mulf %39, %35 : vector<4x128xf32>
      %41 = arith.subf %38, %40 : vector<4x128xf32>
      %42 = vector.broadcast %29 : vector<1x128xf32> to vector<4x128xf32>
      %43 = arith.mulf %42, %35 : vector<4x128xf32>
      %44 = arith.addf %27, %43 : vector<4x128xf32>
      %45 = vector.broadcast %31 : vector<1x128xf32> to vector<4x128xf32>
      %46 = arith.mulf %45, %33 : vector<4x128xf32>
      %47 = arith.addf %44, %46 : vector<4x128xf32>
      %c0_41 = arith.constant 0 : index
      %c0_42 = arith.constant 0 : index
      %c0_43 = arith.constant 0 : index
      %c2 = arith.constant 2 : index
      %c0_44 = arith.constant 0 : index
      %48 = vector.load %arg3[%c0_41, %c0_42, %c0_43, %c2, %c0_44] : memref<2x1x2x4x128xf32, #tpu.memory_space<vmem>>, vector<1x1x1x1x128xf32>
      %49 = vector.shape_cast %48 : vector<1x1x1x1x128xf32> to vector<1x128xf32>
      %c0_45 = arith.constant 0 : index
      %c0_46 = arith.constant 0 : index
      %c1_47 = arith.constant 1 : index
      %c2_48 = arith.constant 2 : index
      %c0_49 = arith.constant 0 : index
      %50 = vector.load %arg3[%c0_45, %c0_46, %c1_47, %c2_48, %c0_49] : memref<2x1x2x4x128xf32, #tpu.memory_space<vmem>>, vector<1x1x1x1x128xf32>
      %51 = vector.shape_cast %50 : vector<1x1x1x1x128xf32> to vector<1x128xf32>
      %c0_50 = arith.constant 0 : index
      %c0_51 = arith.constant 0 : index
      %c2_52 = arith.constant 2 : index
      %c0_53 = arith.constant 0 : index
      %c0_54 = arith.constant 0 : index
      %52 = vector.load %arg4[%c0_50, %c0_51, %c2_52, %c0_53, %c0_54] : memref<1x2x4x4x128xf32, #tpu.memory_space<vmem>>, vector<1x1x1x4x128xf32>
      %53 = vector.shape_cast %52 : vector<1x1x1x4x128xf32> to vector<4x128xf32>
      %c0_55 = arith.constant 0 : index
      %c1_56 = arith.constant 1 : index
      %c2_57 = arith.constant 2 : index
      %c0_58 = arith.constant 0 : index
      %c0_59 = arith.constant 0 : index
      %54 = vector.load %arg4[%c0_55, %c1_56, %c2_57, %c0_58, %c0_59] : memref<1x2x4x4x128xf32, #tpu.memory_space<vmem>>, vector<1x1x1x4x128xf32>
      %55 = vector.shape_cast %54 : vector<1x1x1x4x128xf32> to vector<4x128xf32>
      %56 = vector.broadcast %49 : vector<1x128xf32> to vector<4x128xf32>
      %57 = arith.mulf %56, %53 : vector<4x128xf32>
      %58 = arith.addf %41, %57 : vector<4x128xf32>
      %59 = vector.broadcast %51 : vector<1x128xf32> to vector<4x128xf32>
      %60 = arith.mulf %59, %55 : vector<4x128xf32>
      %61 = arith.subf %58, %60 : vector<4x128xf32>
      %62 = vector.broadcast %49 : vector<1x128xf32> to vector<4x128xf32>
      %63 = arith.mulf %62, %55 : vector<4x128xf32>
      %64 = arith.addf %47, %63 : vector<4x128xf32>
      %65 = vector.broadcast %51 : vector<1x128xf32> to vector<4x128xf32>
      %66 = arith.mulf %65, %53 : vector<4x128xf32>
      %67 = arith.addf %64, %66 : vector<4x128xf32>
      %c0_60 = arith.constant 0 : index
      %c0_61 = arith.constant 0 : index
      %c0_62 = arith.constant 0 : index
      %c3 = arith.constant 3 : index
      %c0_63 = arith.constant 0 : index
      %68 = vector.load %arg3[%c0_60, %c0_61, %c0_62, %c3, %c0_63] : memref<2x1x2x4x128xf32, #tpu.memory_space<vmem>>, vector<1x1x1x1x128xf32>
      %69 = vector.shape_cast %68 : vector<1x1x1x1x128xf32> to vector<1x128xf32>
      %c0_64 = arith.constant 0 : index
      %c0_65 = arith.constant 0 : index
      %c1_66 = arith.constant 1 : index
      %c3_67 = arith.constant 3 : index
      %c0_68 = arith.constant 0 : index
      %70 = vector.load %arg3[%c0_64, %c0_65, %c1_66, %c3_67, %c0_68] : memref<2x1x2x4x128xf32, #tpu.memory_space<vmem>>, vector<1x1x1x1x128xf32>
      %71 = vector.shape_cast %70 : vector<1x1x1x1x128xf32> to vector<1x128xf32>
      %c0_69 = arith.constant 0 : index
      %c0_70 = arith.constant 0 : index
      %c3_71 = arith.constant 3 : index
      %c0_72 = arith.constant 0 : index
      %c0_73 = arith.constant 0 : index
      %72 = vector.load %arg4[%c0_69, %c0_70, %c3_71, %c0_72, %c0_73] : memref<1x2x4x4x128xf32, #tpu.memory_space<vmem>>, vector<1x1x1x4x128xf32>
      %73 = vector.shape_cast %72 : vector<1x1x1x4x128xf32> to vector<4x128xf32>
      %c0_74 = arith.constant 0 : index
      %c1_75 = arith.constant 1 : index
      %c3_76 = arith.constant 3 : index
      %c0_77 = arith.constant 0 : index
      %c0_78 = arith.constant 0 : index
      %74 = vector.load %arg4[%c0_74, %c1_75, %c3_76, %c0_77, %c0_78] : memref<1x2x4x4x128xf32, #tpu.memory_space<vmem>>, vector<1x1x1x4x128xf32>
      %75 = vector.shape_cast %74 : vector<1x1x1x4x128xf32> to vector<4x128xf32>
      %76 = vector.broadcast %69 : vector<1x128xf32> to vector<4x128xf32>
      %77 = arith.mulf %76, %73 : vector<4x128xf32>
      %78 = arith.addf %61, %77 : vector<4x128xf32>
      %79 = vector.broadcast %71 : vector<1x128xf32> to vector<4x128xf32>
      %80 = arith.mulf %79, %75 : vector<4x128xf32>
      %81 = arith.subf %78, %80 : vector<4x128xf32>
      %82 = vector.broadcast %69 : vector<1x128xf32> to vector<4x128xf32>
      %83 = arith.mulf %82, %75 : vector<4x128xf32>
      %84 = arith.addf %67, %83 : vector<4x128xf32>
      %85 = vector.broadcast %71 : vector<1x128xf32> to vector<4x128xf32>
      %86 = arith.mulf %85, %73 : vector<4x128xf32>
      %87 = arith.addf %84, %86 : vector<4x128xf32>
      %c0_79 = arith.constant 0 : index
      %c0_80 = arith.constant 0 : index
      %c0_81 = arith.constant 0 : index
      %c0_82 = arith.constant 0 : index
      %c0_83 = arith.constant 0 : index
      %88 = vector.load %arg5[%c0_79, %c0_80, %c0_81, %c0_82, %c0_83] : memref<2x1x2x4x128xf32, #tpu.memory_space<vmem>>, vector<1x1x1x4x128xf32>
      %89 = vector.shape_cast %88 : vector<1x1x1x4x128xf32> to vector<4x128xf32>
      %90 = vector.shape_cast %81 : vector<4x128xf32> to vector<1x1x1x4x128xf32>
      tpu.vector_store %arg5[%c0_79, %c0_80, %c0_81, %c0_82, %c0_83], %90 {strides = array<i32>} : memref<2x1x2x4x128xf32, #tpu.memory_space<vmem>>, vector<1x1x1x4x128xf32>,
      %c0_84 = arith.constant 0 : index
      %c0_85 = arith.constant 0 : index
      %c1_86 = arith.constant 1 : index
      %c0_87 = arith.constant 0 : index
      %c0_88 = arith.constant 0 : index
      %91 = vector.load %arg5[%c0_84, %c0_85, %c1_86, %c0_87, %c0_88] : memref<2x1x2x4x128xf32, #tpu.memory_space<vmem>>, vector<1x1x1x4x128xf32>
      %92 = vector.shape_cast %91 : vector<1x1x1x4x128xf32> to vector<4x128xf32>
      %93 = vector.shape_cast %87 : vector<4x128xf32> to vector<1x1x1x4x128xf32>
      tpu.vector_store %arg5[%c0_84, %c0_85, %c1_86, %c0_87, %c0_88], %93 {strides = array<i32>} : memref<2x1x2x4x128xf32, #tpu.memory_space<vmem>>, vector<1x1x1x4x128xf32>,
      %cst_89 = arith.constant 0.000000e+00 : f32
      %94 = vector.broadcast %cst_89 : f32 to vector<4x128xf32>
      %cst_90 = arith.constant 0.000000e+00 : f32
      %95 = vector.broadcast %cst_90 : f32 to vector<4x128xf32>
      %c1_91 = arith.constant 1 : index
      %c0_92 = arith.constant 0 : index
      %c0_93 = arith.constant 0 : index
      %c0_94 = arith.constant 0 : index
      %c0_95 = arith.constant 0 : index
      %96 = vector.load %arg3[%c1_91, %c0_92, %c0_93, %c0_94, %c0_95] : memref<2x1x2x4x128xf32, #tpu.memory_space<vmem>>, vector<1x1x1x1x128xf32>
      %97 = vector.shape_cast %96 : vector<1x1x1x1x128xf32> to vector<1x128xf32>
      %c1_96 = arith.constant 1 : index
      %c0_97 = arith.constant 0 : index
      %c1_98 = arith.constant 1 : index
      %c0_99 = arith.constant 0 : index
      %c0_100 = arith.constant 0 : index
      %98 = vector.load %arg3[%c1_96, %c0_97, %c1_98, %c0_99, %c0_100] : memref<2x1x2x4x128xf32, #tpu.memory_space<vmem>>, vector<1x1x1x1x128xf32>
      %99 = vector.shape_cast %98 : vector<1x1x1x1x128xf32> to vector<1x128xf32>
      %c0_101 = arith.constant 0 : index
      %c0_102 = arith.constant 0 : index
      %c0_103 = arith.constant 0 : index
      %c0_104 = arith.constant 0 : index
      %c0_105 = arith.constant 0 : index
      %100 = vector.load %arg4[%c0_101, %c0_102, %c0_103, %c0_104, %c0_105] : memref<1x2x4x4x128xf32, #tpu.memory_space<vmem>>, vector<1x1x1x4x128xf32>
      %101 = vector.shape_cast %100 : vector<1x1x1x4x128xf32> to vector<4x128xf32>
      %c0_106 = arith.constant 0 : index
      %c1_107 = arith.constant 1 : index
      %c0_108 = arith.constant 0 : index
      %c0_109 = arith.constant 0 : index
      %c0_110 = arith.constant 0 : index
      %102 = vector.load %arg4[%c0_106, %c1_107, %c0_108, %c0_109, %c0_110] : memref<1x2x4x4x128xf32, #tpu.memory_space<vmem>>, vector<1x1x1x4x128xf32>
      %103 = vector.shape_cast %102 : vector<1x1x1x4x128xf32> to vector<4x128xf32>
      %104 = vector.broadcast %97 : vector<1x128xf32> to vector<4x128xf32>
      %105 = arith.mulf %104, %101 : vector<4x128xf32>
      %106 = arith.addf %94, %105 : vector<4x128xf32>
      %107 = vector.broadcast %99 : vector<1x128xf32> to vector<4x128xf32>
      %108 = arith.mulf %107, %103 : vector<4x128xf32>
      %109 = arith.subf %106, %108 : vector<4x128xf32>
      %110 = vector.broadcast %97 : vector<1x128xf32> to vector<4x128xf32>
      %111 = arith.mulf %110, %103 : vector<4x128xf32>
      %112 = arith.addf %95, %111 : vector<4x128xf32>
      %113 = vector.broadcast %99 : vector<1x128xf32> to vector<4x128xf32>
      %114 = arith.mulf %113, %101 : vector<4x128xf32>
      %115 = arith.addf %112, %114 : vector<4x128xf32>
      %c1_111 = arith.constant 1 : index
      %c0_112 = arith.constant 0 : index
      %c0_113 = arith.constant 0 : index
      %c1_114 = arith.constant 1 : index
      %c0_115 = arith.constant 0 : index
      %116 = vector.load %arg3[%c1_111, %c0_112, %c0_113, %c1_114, %c0_115] : memref<2x1x2x4x128xf32, #tpu.memory_space<vmem>>, vector<1x1x1x1x128xf32>
      %117 = vector.shape_cast %116 : vector<1x1x1x1x128xf32> to vector<1x128xf32>
      %c1_116 = arith.constant 1 : index
      %c0_117 = arith.constant 0 : index
      %c1_118 = arith.constant 1 : index
      %c1_119 = arith.constant 1 : index
      %c0_120 = arith.constant 0 : index
      %118 = vector.load %arg3[%c1_116, %c0_117, %c1_118, %c1_119, %c0_120] : memref<2x1x2x4x128xf32, #tpu.memory_space<vmem>>, vector<1x1x1x1x128xf32>
      %119 = vector.shape_cast %118 : vector<1x1x1x1x128xf32> to vector<1x128xf32>
      %c0_121 = arith.constant 0 : index
      %c0_122 = arith.constant 0 : index
      %c1_123 = arith.constant 1 : index
      %c0_124 = arith.constant 0 : index
      %c0_125 = arith.constant 0 : index
      %120 = vector.load %arg4[%c0_121, %c0_122, %c1_123, %c0_124, %c0_125] : memref<1x2x4x4x128xf32, #tpu.memory_space<vmem>>, vector<1x1x1x4x128xf32>
      %121 = vector.shape_cast %120 : vector<1x1x1x4x128xf32> to vector<4x128xf32>
      %c0_126 = arith.constant 0 : index
      %c1_127 = arith.constant 1 : index
      %c1_128 = arith.constant 1 : index
      %c0_129 = arith.constant 0 : index
      %c0_130 = arith.constant 0 : index
      %122 = vector.load %arg4[%c0_126, %c1_127, %c1_128, %c0_129, %c0_130] : memref<1x2x4x4x128xf32, #tpu.memory_space<vmem>>, vector<1x1x1x4x128xf32>
      %123 = vector.shape_cast %122 : vector<1x1x1x4x128xf32> to vector<4x128xf32>
      %124 = vector.broadcast %117 : vector<1x128xf32> to vector<4x128xf32>
      %125 = arith.mulf %124, %121 : vector<4x128xf32>
      %126 = arith.addf %109, %125 : vector<4x128xf32>
      %127 = vector.broadcast %119 : vector<1x128xf32> to vector<4x128xf32>
      %128 = arith.mulf %127, %123 : vector<4x128xf32>
      %129 = arith.subf %126, %128 : vector<4x128xf32>
      %130 = vector.broadcast %117 : vector<1x128xf32> to vector<4x128xf32>
      %131 = arith.mulf %130, %123 : vector<4x128xf32>
      %132 = arith.addf %115, %131 : vector<4x128xf32>
      %133 = vector.broadcast %119 : vector<1x128xf32> to vector<4x128xf32>
      %134 = arith.mulf %133, %121 : vector<4x128xf32>
      %135 = arith.addf %132, %134 : vector<4x128xf32>
      %c1_131 = arith.constant 1 : index
      %c0_132 = arith.constant 0 : index
      %c0_133 = arith.constant 0 : index
      %c2_134 = arith.constant 2 : index
      %c0_135 = arith.constant 0 : index
      %136 = vector.load %arg3[%c1_131, %c0_132, %c0_133, %c2_134, %c0_135] : memref<2x1x2x4x128xf32, #tpu.memory_space<vmem>>, vector<1x1x1x1x128xf32>
      %137 = vector.shape_cast %136 : vector<1x1x1x1x128xf32> to vector<1x128xf32>
      %c1_136 = arith.constant 1 : index
      %c0_137 = arith.constant 0 : index
      %c1_138 = arith.constant 1 : index
      %c2_139 = arith.constant 2 : index
      %c0_140 = arith.constant 0 : index
      %138 = vector.load %arg3[%c1_136, %c0_137, %c1_138, %c2_139, %c0_140] : memref<2x1x2x4x128xf32, #tpu.memory_space<vmem>>, vector<1x1x1x1x128xf32>
      %139 = vector.shape_cast %138 : vector<1x1x1x1x128xf32> to vector<1x128xf32>
      %c0_141 = arith.constant 0 : index
      %c0_142 = arith.constant 0 : index
      %c2_143 = arith.constant 2 : index
      %c0_144 = arith.constant 0 : index
      %c0_145 = arith.constant 0 : index
      %140 = vector.load %arg4[%c0_141, %c0_142, %c2_143, %c0_144, %c0_145] : memref<1x2x4x4x128xf32, #tpu.memory_space<vmem>>, vector<1x1x1x4x128xf32>
      %141 = vector.shape_cast %140 : vector<1x1x1x4x128xf32> to vector<4x128xf32>
      %c0_146 = arith.constant 0 : index
      %c1_147 = arith.constant 1 : index
      %c2_148 = arith.constant 2 : index
      %c0_149 = arith.constant 0 : index
      %c0_150 = arith.constant 0 : index
      %142 = vector.load %arg4[%c0_146, %c1_147, %c2_148, %c0_149, %c0_150] : memref<1x2x4x4x128xf32, #tpu.memory_space<vmem>>, vector<1x1x1x4x128xf32>
      %143 = vector.shape_cast %142 : vector<1x1x1x4x128xf32> to vector<4x128xf32>
      %144 = vector.broadcast %137 : vector<1x128xf32> to vector<4x128xf32>
      %145 = arith.mulf %144, %141 : vector<4x128xf32>
      %146 = arith.addf %129, %145 : vector<4x128xf32>
      %147 = vector.broadcast %139 : vector<1x128xf32> to vector<4x128xf32>
      %148 = arith.mulf %147, %143 : vector<4x128xf32>
      %149 = arith.subf %146, %148 : vector<4x128xf32>
      %150 = vector.broadcast %137 : vector<1x128xf32> to vector<4x128xf32>
      %151 = arith.mulf %150, %143 : vector<4x128xf32>
      %152 = arith.addf %135, %151 : vector<4x128xf32>
      %153 = vector.broadcast %139 : vector<1x128xf32> to vector<4x128xf32>
      %154 = arith.mulf %153, %141 : vector<4x128xf32>
      %155 = arith.addf %152, %154 : vector<4x128xf32>
      %c1_151 = arith.constant 1 : index
      %c0_152 = arith.constant 0 : index
      %c0_153 = arith.constant 0 : index
      %c3_154 = arith.constant 3 : index
      %c0_155 = arith.constant 0 : index
      %156 = vector.load %arg3[%c1_151, %c0_152, %c0_153, %c3_154, %c0_155] : memref<2x1x2x4x128xf32, #tpu.memory_space<vmem>>, vector<1x1x1x1x128xf32>
      %157 = vector.shape_cast %156 : vector<1x1x1x1x128xf32> to vector<1x128xf32>
      %c1_156 = arith.constant 1 : index
      %c0_157 = arith.constant 0 : index
      %c1_158 = arith.constant 1 : index
      %c3_159 = arith.constant 3 : index
      %c0_160 = arith.constant 0 : index
      %158 = vector.load %arg3[%c1_156, %c0_157, %c1_158, %c3_159, %c0_160] : memref<2x1x2x4x128xf32, #tpu.memory_space<vmem>>, vector<1x1x1x1x128xf32>
      %159 = vector.shape_cast %158 : vector<1x1x1x1x128xf32> to vector<1x128xf32>
      %c0_161 = arith.constant 0 : index
      %c0_162 = arith.constant 0 : index
      %c3_163 = arith.constant 3 : index
      %c0_164 = arith.constant 0 : index
      %c0_165 = arith.constant 0 : index
      %160 = vector.load %arg4[%c0_161, %c0_162, %c3_163, %c0_164, %c0_165] : memref<1x2x4x4x128xf32, #tpu.memory_space<vmem>>, vector<1x1x1x4x128xf32>
      %161 = vector.shape_cast %160 : vector<1x1x1x4x128xf32> to vector<4x128xf32>
      %c0_166 = arith.constant 0 : index
      %c1_167 = arith.constant 1 : index
      %c3_168 = arith.constant 3 : index
      %c0_169 = arith.constant 0 : index
      %c0_170 = arith.constant 0 : index
      %162 = vector.load %arg4[%c0_166, %c1_167, %c3_168, %c0_169, %c0_170] : memref<1x2x4x4x128xf32, #tpu.memory_space<vmem>>, vector<1x1x1x4x128xf32>
      %163 = vector.shape_cast %162 : vector<1x1x1x4x128xf32> to vector<4x128xf32>
      %164 = vector.broadcast %157 : vector<1x128xf32> to vector<4x128xf32>
      %165 = arith.mulf %164, %161 : vector<4x128xf32>
      %166 = arith.addf %149, %165 : vector<4x128xf32>
      %167 = vector.broadcast %159 : vector<1x128xf32> to vector<4x128xf32>
      %168 = arith.mulf %167, %163 : vector<4x128xf32>
      %169 = arith.subf %166, %168 : vector<4x128xf32>
      %170 = vector.broadcast %157 : vector<1x128xf32> to vector<4x128xf32>
      %171 = arith.mulf %170, %163 : vector<4x128xf32>
      %172 = arith.addf %155, %171 : vector<4x128xf32>
      %173 = vector.broadcast %159 : vector<1x128xf32> to vector<4x128xf32>
      %174 = arith.mulf %173, %161 : vector<4x128xf32>
      %175 = arith.addf %172, %174 : vector<4x128xf32>
      %c1_171 = arith.constant 1 : index
      %c0_172 = arith.constant 0 : index
      %c0_173 = arith.constant 0 : index
      %c0_174 = arith.constant 0 : index
      %c0_175 = arith.constant 0 : index
      %176 = vector.load %arg5[%c1_171, %c0_172, %c0_173, %c0_174, %c0_175] : memref<2x1x2x4x128xf32, #tpu.memory_space<vmem>>, vector<1x1x1x4x128xf32>
      %177 = vector.shape_cast %176 : vector<1x1x1x4x128xf32> to vector<4x128xf32>
      %178 = vector.shape_cast %169 : vector<4x128xf32> to vector<1x1x1x4x128xf32>
      tpu.vector_store %arg5[%c1_171, %c0_172, %c0_173, %c0_174, %c0_175], %178 {strides = array<i32>} : memref<2x1x2x4x128xf32, #tpu.memory_space<vmem>>, vector<1x1x1x4x128xf32>,
      %c1_176 = arith.constant 1 : index
      %c0_177 = arith.constant 0 : index
      %c1_178 = arith.constant 1 : index
      %c0_179 = arith.constant 0 : index
      %c0_180 = arith.constant 0 : index
      %179 = vector.load %arg5[%c1_176, %c0_177, %c1_178, %c0_179, %c0_180] : memref<2x1x2x4x128xf32, #tpu.memory_space<vmem>>, vector<1x1x1x4x128xf32>
      %180 = vector.shape_cast %179 : vector<1x1x1x4x128xf32> to vector<4x128xf32>
      %181 = vector.shape_cast %175 : vector<4x128xf32> to vector<1x1x1x4x128xf32>
      tpu.vector_store %arg5[%c1_176, %c0_177, %c1_178, %c0_179, %c0_180], %181 {strides = array<i32>} : memref<2x1x2x4x128xf32, #tpu.memory_space<vmem>>, vector<1x1x1x4x128xf32>,
    } else {
    }
    %c1_i32_0 = arith.constant 1 : i32
    %3 = arith.cmpi sge, %arg1, %c1_i32_0 : i32
    %4 = arith.extui %3 : i1 to i32
    %c0_i32_1 = arith.constant 0 : i32
    %5 = arith.cmpi ne, %4, %c0_i32_1 : i32
    scf.if %5 {
      %cst = arith.constant 0.000000e+00 : f32
      %6 = vector.broadcast %cst : f32 to vector<2x1x2x4x128xf32>
      %c0 = arith.constant 0 : index
      %c0_2 = arith.constant 0 : index
      %c0_3 = arith.constant 0 : index
      %c0_4 = arith.constant 0 : index
      %c0_5 = arith.constant 0 : index
      %7 = vector.load %arg5[%c0, %c0_2, %c0_3, %c0_4, %c0_5] : memref<2x1x2x4x128xf32, #tpu.memory_space<vmem>>, vector<2x1x2x4x128xf32>
      tpu.vector_store %arg5[%c0, %c0_2, %c0_3, %c0_4, %c0_5], %6 {strides = array<i32>} : memref<2x1x2x4x128xf32, #tpu.memory_space<vmem>>, vector<2x1x2x4x128xf32>,
    } else {
    }
    return
  }
  func.func @transform_0(%arg0: i32, %arg1: i32, %arg2: i32) -> (i32, i32, i32, i32, i32) {
    %c0_i32 = arith.constant 0 : i32
    %0 = arith.minsi %arg1, %c0_i32 : i32
    %c0_i32_0 = arith.constant 0 : i32
    %c0_i32_1 = arith.constant 0 : i32
    %c0_i32_2 = arith.constant 0 : i32
    return %arg2, %arg0, %c0_i32_0, %c0_i32_1, %0 : i32, i32, i32, i32, i32
  }
  func.func @transform_1(%arg0: i32, %arg1: i32, %arg2: i32) -> (i32, i32, i32, i32, i32) {
    %c0_i32 = arith.constant 0 : i32
    %0 = arith.minsi %arg1, %c0_i32 : i32
    %c0_i32_0 = arith.constant 0 : i32
    %c0_i32_1 = arith.constant 0 : i32
    %c0_i32_2 = arith.constant 0 : i32
    %c0_i32_3 = arith.constant 0 : i32
    return %arg0, %c0_i32_0, %c0_i32_1, %c0_i32_2, %0 : i32, i32, i32, i32, i32
  }
  func.func @transform_2(%arg0: i32, %arg1: i32, %arg2: i32) -> (i32, i32, i32, i32, i32) {
    %c0_i32 = arith.constant 0 : i32
    %c0_i32_0 = arith.constant 0 : i32
    %c0_i32_1 = arith.constant 0 : i32
    return %arg2, %arg0, %c0_i32, %c0_i32_0, %arg1 : i32, i32, i32, i32, i32
  }
}

</mosaic_0001>

<llo_original>
// kernel: tpu_custom_call.1
$region0: #{tpu_custom_call.1}
  #allocation0 [shape = 'u32[]', space=smem, size = 0x4, offset = 0x4, fixed_abs, tag = 'smem constant byte address 0x4 - core index']
  #allocation1 [shape = 'u32[72,128]{1,0:T(1,128)}', space=vmem, size = 0x9000, scoped, tag = 'internal scratch']
  #allocation8 [shape = 's32[]', space=sflag, size = 0x4, offset = 0, fixed_abs, tag = 'sflag constant byte address 0x0 - dummy sync flag']
  #allocation10 [shape = 's32[]', space=sflag, size = 0x4, offset = 0, fixed_abs, tag = 'sflag constant byte address 0x0 - dummy sync flag']
  %s0 = inlined_call_operand.hbm [shape: f32[2,8,2,4,128], index: 0, kind: input, shape index: {}]
  %s1 = inlined_call_operand.hbm [shape: f32[8,2,4,4,128], index: 1, kind: input, shape index: {}]
  %s2 = inlined_call_operand.hbm [shape: f32[2,8,2,4,128], index: 2, kind: output, shape index: {}]
  %s3 = sld [smem:[#allocation0]]
  $region57: #{tpu_custom_call.1} parent=0
    _
  %s5 = ssub.s32 1, %s3
  %s6 = scalar_select 0, %s5, %s3
  $region1: #{tpu_custom_call.1} parent=0
    #allocation2 [shape = 'u8[16384]{0}', space=vmem, size = 0x4000, scoped, tag = 'input window, operand 0']
    #allocation3 [shape = 's32[2]{0}', space=sflag, size = 0x8, scoped, tag = 'scoped memory for tpu_custom_call.1']
    #allocation4 [shape = 's32[2]{0}', space=sflag, size = 0x8, scoped, tag = 'scoped memory for tpu_custom_call.1']
    #allocation5 [shape = 'u8[32768]{0}', space=vmem, size = 0x8000, scoped, tag = 'input window, operand 1']
    #allocation6 [shape = 's32[2]{0}', space=sflag, size = 0x8, scoped, tag = 'scoped memory for tpu_custom_call.1']
    #allocation7 [shape = 'u8[16384]{0}', space=vmem, size = 0x4000, scoped, tag = 'output window, operand 0']
    %7 = vsyncpa [#allocation3], 0
    %s8 = scalar_lea.sflag [#allocation3], 1
    %9 = vsyncpa %s8, 0
    %10 = vsyncpa [#allocation6], 0
    %s11 = scalar_lea.sflag [#allocation6], 1
    %12 = vsyncpa %s11, 0
    %13 = vsyncpa [#allocation4], 0
    %s14 = scalar_lea.sflag [#allocation4], 1
    %15 = vsyncpa %s14, 0
    loop: start=0, step=1, limit=10
    $region2: #{tpu_custom_call.1} parent=1 // loop_pre_header
      _
    $region3: #{tpu_custom_call.1} parent=1 // loop_header
      %s17 = sphi 0, %s21
      %p18 = scmp.ge.s32.totalorder %s17, 10
      %s24 = sphi 0, %s43
      %s25 = sphi 0, %s39
      %s26 = sphi 0, %s35
      %s27 = sphi 0, %s24
      %s28 = sphi 0, %s25
      %s29 = sphi 0, %s26
      %s30 = sphi 0, %s27
      %s31 = sphi 0, %s28
      %s32 = sphi 0, %s29
      %s54 = sphi 0, %s56
      %s57 = sphi 0, %s54
      %s58 = sphi 0, %s57
      %s74 = sphi 0, %s58
      %s86 = sphi 0, %s88
      %s89 = sphi 0, %s86
      %s90 = sphi 0, %s89
      %s106 = sphi 0, %s90
      %s116 = sphi 0, %s118
      %s119 = sphi 0, %s116
      %s120 = sphi 0, %s119
      %s136 = sphi 0, %s120
    $region4: #{tpu_custom_call.1} parent=1 // loop_header_branch
      %20 = sbr.rel (%p18) target = $region8
    $region5: #{tpu_custom_call.1} parent=1 // loop_body
      %s22 = ssub.s32 %s17, 1
      %s23 = ssub.s32 %s17, 2
      %s33 = sadd.s32 1, %s26
      %p34 = scmp.ge.s32.totalorder %s33, 1
      %s35 = scalar_select %p34, 0, %s33
      %s36 = sadd.s32 1, %s25
      %s37 = scalar_select %p34, %s36, %s25
      %p38 = scmp.ge.s32.totalorder %s37, 1
      %s39 = scalar_select %p38, 0, %s37
      %s40 = sadd.s32 1, %s24
      %s41 = scalar_select %p38, %s40, %s24
      %p42 = scmp.ge.s32.totalorder %s41, 8
      %s43 = scalar_select %p42, 0, %s41
      %p44 = scmp.lt.s32.totalorder %s25, 0
      %s45 = scalar_select %p44, %s25, 0
      %p46 = scmp.lt.s32.totalorder %s39, 0
      %s47 = scalar_select %p46, %s39, 0
      %s48 = ssub.s32 %s26, %s35
      %s49 = ssub.s32 %s24, %s43
      %s50 = sor.u32 %s48, %s49
      %s51 = ssub.s32 %s45, %s47
      %s52 = sor.u32 %s50, %s51
      %p53 = scmp.eq.s32.totalorder %s52, 0
      %s55 = sadd.s32 %s54, 1
      %s56 = scalar_select %p53, %s54, %s55
      %p59 = pneg %p53
      %p60 = scmp.eq.s32.totalorder %s17, 7
      %p61 = por %p59, %p60
      %p62 = scmp.ne.s32.totalorder %s54, %s57
      %p63 = scmp.eq.s32.totalorder %s17, 0
      %p64 = por %p62, %p63
      %p65 = scmp.ne.s32.totalorder %s54, %s57
      %p66 = scmp.eq.s32.totalorder %s22, 7
      %p67 = por %p65, %p66
      %p68 = scmp.ne.s32.totalorder %s57, %s58
      %p69 = scmp.eq.s32.totalorder %s22, 0
      %p70 = por %p68, %p69
      %p71 = scmp.ne.s32.totalorder %s57, %s58
      %p72 = scmp.eq.s32.totalorder %s23, 7
      %p73 = por %p71, %p72
      %p75 = scmp.ne.s32.totalorder %s58, %s74
      %p76 = scmp.eq.s32.totalorder %s23, 0
      %p77 = por %p75, %p76
      %p78 = scmp.lt.s32.totalorder %s25, 0
      %s79 = scalar_select %p78, %s25, 0
      %p80 = scmp.lt.s32.totalorder %s39, 0
      %s81 = scalar_select %p80, %s39, 0
      %s82 = ssub.s32 %s24, %s43
      %s83 = ssub.s32 %s79, %s81
      %s84 = sor.u32 %s82, %s83
      %p85 = scmp.eq.s32.totalorder %s84, 0
      %s87 = sadd.s32 %s86, 1
      %s88 = scalar_select %p85, %s86, %s87
      %p91 = pneg %p85
      %p92 = scmp.eq.s32.totalorder %s17, 7
      %p93 = por %p91, %p92
      %p94 = scmp.ne.s32.totalorder %s86, %s89
      %p95 = scmp.eq.s32.totalorder %s17, 0
      %p96 = por %p94, %p95
      %p97 = scmp.ne.s32.totalorder %s86, %s89
      %p98 = scmp.eq.s32.totalorder %s22, 7
      %p99 = por %p97, %p98
      %p100 = scmp.ne.s32.totalorder %s89, %s90
      %p101 = scmp.eq.s32.totalorder %s22, 0
      %p102 = por %p100, %p101
      %p103 = scmp.ne.s32.totalorder %s89, %s90
      %p104 = scmp.eq.s32.totalorder %s23, 7
      %p105 = por %p103, %p104
      %p107 = scmp.ne.s32.totalorder %s90, %s106
      %p108 = scmp.eq.s32.totalorder %s23, 0
      %p109 = por %p107, %p108
      %s110 = ssub.s32 %s26, %s35
      %s111 = ssub.s32 %s24, %s43
      %s112 = sor.u32 %s110, %s111
      %s113 = ssub.s32 %s25, %s39
      %s114 = sor.u32 %s112, %s113
      %p115 = scmp.eq.s32.totalorder %s114, 0
      %s117 = sadd.s32 %s116, 1
      %s118 = scalar_select %p115, %s116, %s117
      %p121 = pneg %p115
      %p122 = scmp.eq.s32.totalorder %s17, 7
      %p123 = por %p121, %p122
      %p124 = scmp.ne.s32.totalorder %s116, %s119
      %p125 = scmp.eq.s32.totalorder %s17, 0
      %p126 = por %p124, %p125
      %p127 = scmp.ne.s32.totalorder %s116, %s119
      %p128 = scmp.eq.s32.totalorder %s22, 7
      %p129 = por %p127, %p128
      %p130 = scmp.ne.s32.totalorder %s119, %s120
      %p131 = scmp.eq.s32.totalorder %s22, 0
      %p132 = por %p130, %p131
      %p133 = scmp.ne.s32.totalorder %s119, %s120
      %p134 = scmp.eq.s32.totalorder %s23, 7
      %p135 = por %p133, %p134
      %p137 = scmp.ne.s32.totalorder %s120, %s136
      %p138 = scmp.eq.s32.totalorder %s23, 0
      %p139 = por %p137, %p138
      %p140 = scmp.le.s32.totalorder 1, %s17
      %p141 = scmp.lt.s32.totalorder %s17, 9
      %p142 = pnand %p140, %p141
      %p143 = pneg %p142
      // Predicated region
      $region9: #{tpu_custom_call.1} parent=5 // pred_check
        _
      $region10: #{tpu_custom_call.1} parent=5 // pred_check_branch
        %145 = sbr.rel (%p142) target = $region12
      $region11: #{tpu_custom_call.1} parent=5 // pred_region
        %s146 = ssub.s32 %s17, 1
      $region12: #{tpu_custom_call.1} parent=5 // pred_fallthru
        _
      %p147 = scmp.lt.s32.totalorder %s17, 8
      // Predicated region
      $region13: #{tpu_custom_call.1} parent=5 // pred_check
        %p148 = pneg %p147
      $region14: #{tpu_custom_call.1} parent=5 // pred_check_branch
        %150 = sbr.rel (%p148) target = $region16
      $region15: #{tpu_custom_call.1} parent=5 // pred_region
        // Predicated region
        $region17: #{tpu_custom_call.1} parent=15 // pred_check
          %p151 = pneg %p64
        $region18: #{tpu_custom_call.1} parent=15 // pred_check_branch
          %153 = sbr.rel (%p151) target = $region20
        $region19: #{tpu_custom_call.1} parent=15 // pred_region
          #allocation9 [shape = 'u32[6]{0}', space=smem, size = 0x18, scoped, tag = 'DMA stride descriptor']
          %s154 = sand.u32 %s54, 1
          %s155 = scalar_lea.sflag [#allocation3], %s154
          %s156 = sand.u32 %s54, 1
          %s157 = smul.addr %s156, 16
          %s158 = scalar_lea.vmem [#allocation2], %s157
          %p159 = scmp.lt.s32.totalorder %s25, 0
          %s160 = scalar_select %p159, %s25, 0
          %s161 = smul.u32 2, %s26
          %163 = vsyncadd %s155, 0
          %s164 = smul.addr %s24, 2
          %s165 = sadd.s32 %s160, %s164
          %s166 = smul.addr %s161, 16
          %s167 = sadd.s32 %s165, %s166
          %s168 = smul.addr %s167, 4
          %s169 = scalar_lea.hbm %s0, %s168
          %s171 = sshll.u32 1, 14
          %s172 = sxor.u32 4294967295, %s171
          %s174 = sld [smem:[#allocation0]]
          %s175 = sadd.s32 2, %s174
          %s177 = sshll.u32 7, 26
          %s178 = sxor.u32 4294967295, %s177
          %s179 = sand.u32 0, %s178
          %s180 = sshll.u32 %s175, 26
          %s181 = sor.u32 %s179, %s180
          %s182 = sshll.u32 %s169, 4
          %s183 = int_to_ptr.hbm [resolvable:$true] %s182
          %s184 = sshll.u32 %s158, 4
          %s185 = int_to_ptr.vmem [resolvable:$true] %s184
          %191 = sst [smem:[#allocation9]] 1024
          %s192 = scalar_lea.smem [#allocation9], 1
          %193 = sst [smem:[%s192]] 128
          %s194 = scalar_lea.smem [#allocation9], 2
          %195 = sst [smem:[%s194]] 2
          %s196 = scalar_lea.smem [#allocation9], 3
          %197 = sst [smem:[%s196]] 64
          %s198 = scalar_lea.smem [#allocation9], 4
          %199 = sst [smem:[%s198]] 64
          %s200 = scalar_lea.smem [#allocation9], 5
          %201 = sst [smem:[%s200]] 4
          %203 = dma.general %s183, 256, %s185, %s155, [#allocation8], [#allocation9], %s181, 0
        $region20: #{tpu_custom_call.1} parent=15 // pred_fallthru
          _
        // Predicated region
        $region21: #{tpu_custom_call.1} parent=15 // pred_check
          %p204 = pneg %p96
        $region22: #{tpu_custom_call.1} parent=15 // pred_check_branch
          %206 = sbr.rel (%p204) target = $region24
        $region23: #{tpu_custom_call.1} parent=15 // pred_region
          %s207 = sand.u32 %s86, 1
          %s208 = scalar_lea.sflag [#allocation6], %s207
          %s209 = sand.u32 %s86, 1
          %s210 = smul.addr %s209, 32
          %s211 = scalar_lea.vmem [#allocation5], %s210
          %p212 = scmp.lt.s32.totalorder %s25, 0
          %s213 = scalar_select %p212, %s25, 0
          %215 = vsyncadd %s208, 0
          %s216 = smul.addr %s24, 8
          %s217 = sadd.s32 %s213, %s216
          %s218 = smul.addr %s217, 4
          %s219 = scalar_lea.hbm %s1, %s218
          %s220 = sshll.u32 %s219, 4
          %s221 = int_to_ptr.hbm [resolvable:$true] %s220
          %s222 = sshll.u32 %s211, 4
          %s223 = int_to_ptr.vmem [resolvable:$true] %s222
          %228 = dma.hbm_to_vmem [thread:$0]  %s221, 512, %s223, %s208, 64, 64, 4
        $region24: #{tpu_custom_call.1} parent=15 // pred_fallthru
          _
      $region16: #{tpu_custom_call.1} parent=5 // pred_fallthru
        _
      %p229 = scmp.le.s32.totalorder 1, %s17
      %p230 = scmp.lt.s32.totalorder %s17, 9
      %p231 = pnand %p229, %p230
      %p232 = pneg %p231
      // Predicated region
      $region25: #{tpu_custom_call.1} parent=5 // pred_check
        _
      $region26: #{tpu_custom_call.1} parent=5 // pred_check_branch
        %234 = sbr.rel (%p231) target = $region28
      $region27: #{tpu_custom_call.1} parent=5 // pred_region
        %s235 = ssub.s32 %s17, 1
        %s236 = sand.u32 %s57, 1
        %s237 = scalar_lea.sflag [#allocation3], %s236
        %s238 = sand.u32 %s57, 1
        %s239 = smul.addr %s238, 16
        %s240 = scalar_lea.vmem [#allocation2], %s239
        // Predicated region
        $region29: #{tpu_custom_call.1} parent=27 // pred_check
          %p241 = pneg %p70
        $region30: #{tpu_custom_call.1} parent=27 // pred_check_branch
          %243 = sbr.rel (%p241) target = $region32
        $region31: #{tpu_custom_call.1} parent=27 // pred_region
          %245 = dma.done %s237, 256
        $region32: #{tpu_custom_call.1} parent=27 // pred_fallthru
          _
        %s246 = sand.u32 %s89, 1
        %s247 = scalar_lea.sflag [#allocation6], %s246
        %s248 = sand.u32 %s89, 1
        %s249 = smul.addr %s248, 32
        %s250 = scalar_lea.vmem [#allocation5], %s249
        // Predicated region
        $region33: #{tpu_custom_call.1} parent=27 // pred_check
          %p251 = pneg %p102
        $region34: #{tpu_custom_call.1} parent=27 // pred_check_branch
          %253 = sbr.rel (%p251) target = $region36
        $region35: #{tpu_custom_call.1} parent=27 // pred_region
          %255 = dma.done %s247, 512
        $region36: #{tpu_custom_call.1} parent=27 // pred_fallthru
          _
        %s256 = sand.u32 %s57, 1
        %s257 = scalar_lea.sflag [#allocation3], %s256
        %s258 = sand.u32 %s57, 1
        %s259 = smul.addr %s258, 16
        %s260 = scalar_lea.vmem [#allocation2], %s259
        %p261 = pneg %p70
        %p262 = pneg %p67
        %s263 = sand.u32 %s89, 1
        %s264 = scalar_lea.sflag [#allocation6], %s263
        %s265 = sand.u32 %s89, 1
        %s266 = smul.addr %s265, 32
        %s267 = scalar_lea.vmem [#allocation5], %s266
        %p268 = pneg %p102
        %p269 = pneg %p99
        %p270 = pneg %p132
        %p271 = pneg %p129
        %s272 = sand.u32 %s119, 1
        %s273 = scalar_lea.sflag [#allocation4], %s272
        %s274 = sand.u32 %s119, 1
        %s275 = smul.addr %s274, 16
        %s276 = scalar_lea.vmem [#allocation7], %s275
        %p277 = scmp.lt.s32.totalorder %s28, 0
        %s278 = scalar_select %p277, %s28, 0
        %s279 = smul.u32 2, %s29
        %p280 = scmp.lt.s32.totalorder %s28, 0
        %s281 = scalar_select %p280, %s28, 0
        %s282 = smul.u32 2, %s29
        %p283 = scmp.lt.s32.totalorder %s28, 1
        // Predicated region
        $region37: #{tpu_custom_call.1} parent=27 // pred_check
          %p284 = pneg %p283
        $region38: #{tpu_custom_call.1} parent=27 // pred_check_branch
          %286 = sbr.rel (%p284) target = $region40
        $region39: #{tpu_custom_call.1} parent=27 // pred_region
          %v287 = vld [vmem:[%s240] sm:$0x1]
          %s288 = scalar_lea.vmem %s240, 4 [#allocation2]
          %v289 = vld [vmem:[%s288] sm:$0x1]
          %v290 = vld [vmem:[%s250] sm:$0xf]
          %s291 = scalar_lea.vmem %s250, 16 [#allocation5]
          %v292 = vld [vmem:[%s291] sm:$0xf]
          %v293 = vperm.slane %v287, 0
          %v294 = vmul.f32 %v293, %v290
          %v295 = vadd.f32 %v294, 0.0
          %v296 = vperm.slane %v289, 0
          %v297 = vmul.f32 %v296, %v292
          %v298 = vsub.f32 %v295, %v297
          %v299 = vmul.f32 %v293, %v292
          %v300 = vadd.f32 %v299, 0.0
          %v301 = vmul.f32 %v296, %v290
          %v302 = vadd.f32 %v300, %v301
          %v303 = vld [vmem:[%s240 + $0x1] sm:$0x1]
          %v304 = vld [vmem:[%s288 + $0x1] sm:$0x1]
          %s305 = scalar_lea.vmem %s250, 4 [#allocation5]
          %v306 = vld [vmem:[%s305] sm:$0xf]
          %s307 = scalar_lea.vmem %s250, 20 [#allocation5]
          %v308 = vld [vmem:[%s307] sm:$0xf]
          %v309 = vperm.slane %v303, 0
          %v310 = vmul.f32 %v309, %v306
          %v311 = vadd.f32 %v298, %v310
          %v312 = vperm.slane %v304, 0
          %v313 = vmul.f32 %v312, %v308
          %v314 = vsub.f32 %v311, %v313
          %v315 = vmul.f32 %v309, %v308
          %v316 = vadd.f32 %v302, %v315
          %v317 = vmul.f32 %v312, %v306
          %v318 = vadd.f32 %v316, %v317
          %v319 = vld [vmem:[%s240 + $0x2] sm:$0x1]
          %v320 = vld [vmem:[%s288 + $0x2] sm:$0x1]
          %s321 = scalar_lea.vmem %s250, 8 [#allocation5]
          %v322 = vld [vmem:[%s321] sm:$0xf]
          %s323 = scalar_lea.vmem %s250, 24 [#allocation5]
          %v324 = vld [vmem:[%s323] sm:$0xf]
          %v325 = vperm.slane %v319, 0
          %v326 = vmul.f32 %v325, %v322
          %v327 = vadd.f32 %v314, %v326
          %v328 = vperm.slane %v320, 0
          %v329 = vmul.f32 %v328, %v324
          %v330 = vsub.f32 %v327, %v329
          %v331 = vmul.f32 %v325, %v324
          %v332 = vadd.f32 %v318, %v331
          %v333 = vmul.f32 %v328, %v322
          %v334 = vadd.f32 %v332, %v333
          %v335 = vld [vmem:[%s240 + $0x3] sm:$0x1]
          %v336 = vld [vmem:[%s288 + $0x3] sm:$0x1]
          %s337 = scalar_lea.vmem %s250, 12 [#allocation5]
          %v338 = vld [vmem:[%s337] sm:$0xf]
          %s339 = scalar_lea.vmem %s250, 28 [#allocation5]
          %v340 = vld [vmem:[%s339] sm:$0xf]
          %v341 = vperm.slane %v335, 0
          %v342 = vmul.f32 %v341, %v338
          %v343 = vadd.f32 %v330, %v342
          %v344 = vperm.slane %v336, 0
          %v345 = vmul.f32 %v344, %v340
          %v346 = vsub.f32 %v343, %v345
          %v347 = vmul.f32 %v341, %v340
          %v348 = vadd.f32 %v334, %v347
          %v349 = vmul.f32 %v344, %v338
          %v350 = vadd.f32 %v348, %v349
          %351 = vst [vmem:[%s276] sm:$0xf] %v346
          %s352 = scalar_lea.vmem %s276, 4 [#allocation7]
          %353 = vst [vmem:[%s352] sm:$0xf] %v350
          %s354 = scalar_lea.vmem %s240, 8 [#allocation2]
          %v355 = vld [vmem:[%s354] sm:$0x1]
          %s356 = scalar_lea.vmem %s240, 12 [#allocation2]
          %v357 = vld [vmem:[%s356] sm:$0x1]
          %v358 = vld [vmem:[%s250] sm:$0xf]
          %v359 = vld [vmem:[%s291] sm:$0xf]
          %v360 = vperm.slane %v355, 0
          %v361 = vmul.f32 %v360, %v358
          %v362 = vadd.f32 %v361, 0.0
          %v363 = vperm.slane %v357, 0
          %v364 = vmul.f32 %v363, %v359
          %v365 = vsub.f32 %v362, %v364
          %v366 = vmul.f32 %v360, %v359
          %v367 = vadd.f32 %v366, 0.0
          %v368 = vmul.f32 %v363, %v358
          %v369 = vadd.f32 %v367, %v368
          %v370 = vld [vmem:[%s354 + $0x1] sm:$0x1]
          %v371 = vld [vmem:[%s356 + $0x1] sm:$0x1]
          %v372 = vld [vmem:[%s305] sm:$0xf]
          %v373 = vld [vmem:[%s307] sm:$0xf]
          %v374 = vperm.slane %v370, 0
          %v375 = vmul.f32 %v374, %v372
          %v376 = vadd.f32 %v365, %v375
          %v377 = vperm.slane %v371, 0
          %v378 = vmul.f32 %v377, %v373
          %v379 = vsub.f32 %v376, %v378
          %v380 = vmul.f32 %v374, %v373
          %v381 = vadd.f32 %v369, %v380
          %v382 = vmul.f32 %v377, %v372
          %v383 = vadd.f32 %v381, %v382
          %v384 = vld [vmem:[%s354 + $0x2] sm:$0x1]
          %v385 = vld [vmem:[%s356 + $0x2] sm:$0x1]
          %v386 = vld [vmem:[%s321] sm:$0xf]
          %v387 = vld [vmem:[%s323] sm:$0xf]
          %v388 = vperm.slane %v384, 0
          %v389 = vmul.f32 %v388, %v386
          %v390 = vadd.f32 %v379, %v389
          %v391 = vperm.slane %v385, 0
          %v392 = vmul.f32 %v391, %v387
          %v393 = vsub.f32 %v390, %v392
          %v394 = vmul.f32 %v388, %v387
          %v395 = vadd.f32 %v383, %v394
          %v396 = vmul.f32 %v391, %v386
          %v397 = vadd.f32 %v395, %v396
          %v398 = vld [vmem:[%s354 + $0x3] sm:$0x1]
          %v399 = vld [vmem:[%s356 + $0x3] sm:$0x1]
          %v400 = vld [vmem:[%s337] sm:$0xf]
          %v401 = vld [vmem:[%s339] sm:$0xf]
          %v402 = vperm.slane %v398, 0
          %v403 = vmul.f32 %v402, %v400
          %v404 = vadd.f32 %v393, %v403
          %v405 = vperm.slane %v399, 0
          %v406 = vmul.f32 %v405, %v401
          %v407 = vsub.f32 %v404, %v406
          %v408 = vmul.f32 %v402, %v401
          %v409 = vadd.f32 %v397, %v408
          %v410 = vmul.f32 %v405, %v400
          %v411 = vadd.f32 %v409, %v410
          %s412 = scalar_lea.vmem %s276, 8 [#allocation7]
          %413 = vst [vmem:[%s412] sm:$0xf] %v407
          %s414 = scalar_lea.vmem %s276, 12 [#allocation7]
          %415 = vst [vmem:[%s414] sm:$0xf] %v411
        $region40: #{tpu_custom_call.1} parent=27 // pred_fallthru
          _
        %p416 = scmp.ge.s32.totalorder %s28, 1
        // Predicated region
        $region41: #{tpu_custom_call.1} parent=27 // pred_check
          %p417 = pneg %p416
        $region42: #{tpu_custom_call.1} parent=27 // pred_check_branch
          %419 = sbr.rel (%p417) target = $region44
        $region43: #{tpu_custom_call.1} parent=27 // pred_region
          %420 = vst [vmem:[%s276] sm:$0xf] 0.0
          %421 = vst [vmem:[%s276 + $0x4] sm:$0xf] 0.0
          %422 = vst [vmem:[%s276 + $0x8] sm:$0xf] 0.0
          %423 = vst [vmem:[%s276 + $0xc] sm:$0xf] 0.0
        $region44: #{tpu_custom_call.1} parent=27 // pred_fallthru
          _
        %s424 = sand.u32 %s119, 1
        %s425 = scalar_lea.sflag [#allocation4], %s424
        %s426 = sand.u32 %s119, 1
        %s427 = smul.addr %s426, 16
        %s428 = scalar_lea.vmem [#allocation7], %s427
        // Predicated region
        $region45: #{tpu_custom_call.1} parent=27 // pred_check
          %p429 = pneg %p129
        $region46: #{tpu_custom_call.1} parent=27 // pred_check_branch
          %431 = sbr.rel (%p429) target = $region48
        $region47: #{tpu_custom_call.1} parent=27 // pred_region
          #allocation11 [shape = 'u32[6]{0}', space=smem, size = 0x18, scoped, tag = 'DMA stride descriptor']
          %s432 = smul.u32 2, %s29
          %434 = vsyncadd %s425, 0
          %s435 = smul.addr %s27, 2
          %s436 = sadd.s32 %s28, %s435
          %s437 = smul.addr %s432, 16
          %s438 = sadd.s32 %s436, %s437
          %s439 = smul.addr %s438, 4
          %s440 = scalar_lea.hbm %s2, %s439
          %s442 = sshll.u32 1, 14
          %s443 = sxor.u32 4294967295, %s442
          %s446 = sshll.u32 7, 18
          %s447 = sxor.u32 4294967295, %s446
          %s448 = sand.u32 0, %s447
          %s450 = sor.u32 %s448, 0
          %s451 = sshll.u32 %s428, 4
          %s452 = int_to_ptr.vmem [resolvable:$true] %s451
          %s453 = sshll.u32 %s440, 4
          %s454 = int_to_ptr.hbm [resolvable:$true] %s453
          %460 = sst [smem:[#allocation11]] 128
          %s461 = scalar_lea.smem [#allocation11], 1
          %462 = sst [smem:[%s461]] 1024
          %s463 = scalar_lea.smem [#allocation11], 2
          %464 = sst [smem:[%s463]] 2
          %s465 = scalar_lea.smem [#allocation11], 3
          %466 = sst [smem:[%s465]] 64
          %s467 = scalar_lea.smem [#allocation11], 4
          %468 = sst [smem:[%s467]] 64
          %s469 = scalar_lea.smem [#allocation11], 5
          %470 = sst [smem:[%s469]] 4
          %472 = dma.general %s452, 256, %s454, %s425, [#allocation10], [#allocation11], %s450, 0
        $region48: #{tpu_custom_call.1} parent=27 // pred_fallthru
          _
      $region28: #{tpu_custom_call.1} parent=5 // pred_fallthru
        _
      %p473 = scmp.le.s32.totalorder 2, %s17
      // Predicated region
      $region49: #{tpu_custom_call.1} parent=5 // pred_check
        %p474 = pneg %p473
      $region50: #{tpu_custom_call.1} parent=5 // pred_check_branch
        %476 = sbr.rel (%p474) target = $region52
      $region51: #{tpu_custom_call.1} parent=5 // pred_region
        %s477 = ssub.s32 %s17, 2
        // Predicated region
        $region53: #{tpu_custom_call.1} parent=51 // pred_check
          %p478 = pneg %p135
        $region54: #{tpu_custom_call.1} parent=51 // pred_check_branch
          %480 = sbr.rel (%p478) target = $region56
        $region55: #{tpu_custom_call.1} parent=51 // pred_region
          %s481 = sand.u32 %s120, 1
          %s482 = scalar_lea.sflag [#allocation4], %s481
          %s483 = sand.u32 %s120, 1
          %s484 = smul.addr %s483, 16
          %s485 = scalar_lea.vmem [#allocation7], %s484
          %487 = dma.done %s482, 256
        $region56: #{tpu_custom_call.1} parent=51 // pred_fallthru
          _
      $region52: #{tpu_custom_call.1} parent=5 // pred_fallthru
        _
    $region6: #{tpu_custom_call.1} parent=1 // loop_footer
      %s21 = sadd.s32 1, %s17
    $region7: #{tpu_custom_call.1} parent=1 // loop_footer_branch
      %16 = sbr.rel target = $region3
    $region8: #{tpu_custom_call.1} parent=1 // loop_exit
      _
    %488 = vsyncpa [#allocation3], 1
    %s489 = scalar_lea.sflag [#allocation3], 1
    %490 = vsyncpa %s489, 1
    %491 = vsyncpa [#allocation6], 1
    %s492 = scalar_lea.sflag [#allocation6], 1
    %493 = vsyncpa %s492, 1
    %494 = vsyncpa [#allocation4], 1
    %s495 = scalar_lea.sflag [#allocation4], 1
    %496 = vsyncpa %s495, 1

</llo_original>
